<compile_context>
chip_gen: v6e
topology: v6e:2x2x1
jax: 0.10.0
libtpu: 0.0.40
codegen_flags: <defaults>
</compile_context>

<pallas_src>
import functools

import jax
import jax.numpy as jnp
import numpy as np
from jax import lax
from jax.experimental import pallas as pl
from jax.experimental.pallas import tpu as pltpu


def _round_up(n, m):
    return ((n + m - 1) // m) * m


def _pick_tile(n, max_tile, align):
    """Largest multiple of `align` that divides `n` and is <= max_tile.
    `n` must itself be a multiple of `align`."""
    t = max(align, min(max_tile, n) // align * align)
    while n % t:
        t -= align
    return t


def _largest_divisor_leq(n, target):
    for d in range(min(target, n), 0, -1):
        if n % d == 0:
            return d
    return 1


def _tpu_generation():
    """Best-effort TPU generation detection: 'v7', 'v6', 'v5', or ''."""
    try:
        kind = jax.devices()[0].device_kind.lower()
    except Exception:
        return ""
    if "v7" in kind:
        return "v7"
    if "v6" in kind:
        return "v6"
    if "v5" in kind:
        return "v5"
    return ""


def _gen_params(gen):
    """(vmem_cap, streamed_block_budget, num_tensorcores, target_t_blk)."""
    if gen == "v7":
        # 64 MiB physical VMEM per TC: never request all of it.
        return 48 << 20, 36 << 20, 2, 16
    if gen in ("v6", "v5"):
        # 128 MiB physical: spend headroom on larger time blocks.
        return 100 << 20, 80 << 20, 1, 32
    # Unknown backend: stay inside conservative scoped-VMEM defaults.
    return 32 << 20, 16 << 20, 1, 16


# ---------------------------------------------------------------------------
# Kernel 1: batched input projection (fully parallel, one MXU GEMM).
#   api = x @ Wx^T + bx          (returned input_projection)
#   rec = x @ Wx^T + bx + bh     (recurrence feed; bh folded out of the loop)
# ---------------------------------------------------------------------------
def _proj_kernel(x_ref, wxT_ref, bx_ref, bxbh_ref, api_ref, rec_ref):
    acc = jnp.dot(x_ref[...], wxT_ref[...], preferred_element_type=jnp.float32)
    api_ref[...] = acc + bx_ref[...]
    rec_ref[...] = acc + bxbh_ref[...]


def _input_projection(x2d_bf16, wxT_bf16, bx_row, bxbh_row):
    m, k = x2d_bf16.shape
    n = wxT_bf16.shape[1]
    tn = _pick_tile(n, 512, 128)
    m_align = 16 if m % 16 == 0 else 8            # bf16 sublane packing
    # Shrink tm so double-buffered blocks stay well inside scoped VMEM.
    budget = 20 << 20
    tm_cap = min(512, m)
    while tm_cap > m_align and 2 * (tm_cap * k * 2 + k * tn * 2
                                    + 2 * tm_cap * tn * 4) > budget:
        tm_cap -= m_align
    tm = _pick_tile(m, max(tm_cap, m_align), m_align)
    # NOTE: K is kept as a single full block; add an 'arbitrary' K grid axis
    # with an f32 acc scratch only if input_size ever gets very large.
    return pl.pallas_call(
        _proj_kernel,
        out_shape=(
            jax.ShapeDtypeStruct((m, n), jnp.float32),
            jax.ShapeDtypeStruct((m, n), jnp.float32),
        ),
        grid_spec=pltpu.PrefetchScalarGridSpec(
            num_scalar_prefetch=0,
            grid=(m // tm, n // tn),
            in_specs=[
                pl.BlockSpec((tm, k), lambda i, j: (i, 0)),
                pl.BlockSpec((k, tn), lambda i, j: (0, j)),
                pl.BlockSpec((1, tn), lambda i, j: (0, j)),
                pl.BlockSpec((1, tn), lambda i, j: (0, j)),
            ],
            out_specs=(
                pl.BlockSpec((tm, tn), lambda i, j: (i, j)),
                pl.BlockSpec((tm, tn), lambda i, j: (i, j)),
            ),
        ),
        compiler_params=pltpu.CompilerParams(
            dimension_semantics=("parallel", "parallel")),
    )(x2d_bf16, wxT_bf16, bx_row, bxbh_row)


# ---------------------------------------------------------------------------
# Kernel 2: serial recurrence over time, t_blk timesteps per grid iteration.
# Grid = (batch_blocks, time_blocks); batch axis "parallel" (v7x megacore),
# time axis "arbitrary" (serial carry in VMEM scratch).
# ---------------------------------------------------------------------------
def _recurrence_kernel(alpha, t_blk, tail_len, unroll,
                       proj_ref, whT_ref, out_ref, hlast_ref, h_scratch):
    tb = pl.program_id(1)
    last_tb = pl.num_programs(1) - 1

    @pl.when(tb == 0)
    def _():
        h_scratch[...] = jnp.zeros_like(h_scratch)   # init_hidden(): zeros

    whT = whT_ref[...]                               # VMEM-resident Wh^T
    one_m_alpha = 1.0 - alpha

    # NOTE: for very large H the next win is driving the MXU explicitly
    # (pltpu.matmul_push_rhs once per time block + matmul_acc_lhs/matmul_pop
    # per step) so the resident Wh^T RHS is not re-streamed every timestep.
    def body(t, h):
        rec = jnp.dot(h.astype(whT.dtype), whT,
                      preferred_element_type=jnp.float32)
        h_new = jnp.maximum(proj_ref[t] + rec, 0.0)  # relu(input2h + h2h)
        h = h * one_m_alpha + h_new * alpha          # leaky / CT update
        out_ref[t] = h.astype(out_ref.dtype)
        return h

    if tail_len == t_blk:
        # t_blk divides seq_len: single clean path, no masking anywhere.
        h = lax.fori_loop(0, t_blk, body, h_scratch[...], unroll=unroll)
        h_scratch[...] = h

        @pl.when(tb == last_tb)
        def _():
            hlast_ref[...] = h.astype(hlast_ref.dtype)
    else:
        # Only the last time block is short: run exactly tail_len real steps
        # there (padded output rows are sliced off by the wrapper).
        @pl.when(tb != last_tb)
        def _():
            h = lax.fori_loop(0, t_blk, body, h_scratch[...], unroll=unroll)
            h_scratch[...] = h

        @pl.when(tb == last_tb)
        def _():
            h = lax.fori_loop(0, tail_len, body, h_scratch[...], unroll=unroll)
            h_scratch[...] = h
            hlast_ref[...] = h.astype(hlast_ref.dtype)


# ---------------------------------------------------------------------------
# Wrapper
# ---------------------------------------------------------------------------
def ctrnn_forward(x, wx, bx, wh, bh, alpha, *, t_blk=None, b_blk=None,
                  h2h_bf16=True):
    """x: (seq, batch, I); wx: (H, I); wh: (H, H); bx, bh: (H,).

    Returns (output (seq,B,H), final hidden (B,H), input_projection (seq,B,H)).

    h2h_bf16: run the recurrent (H,H) matmul with bf16 MXU inputs (f32
    accumulate).  Set False for a full-f32 MXU path when long sequences /
    small alpha make bf16 rounding of the carried state a concern.
    """
    seq, batch, in_sz = x.shape
    hid = wx.shape[0]
    alpha = float(alpha)

    gen = _tpu_generation()
    vmem_cap, stream_budget, num_tc, target_t = _gen_params(gen)

    # TPU-native layout: hidden -> 128 lanes, batch -> 8 sublanes.
    h_pad = _round_up(hid, 128)
    b_pad = _round_up(batch, 8)

    # --- batch blocking (v7x: give the 2 TensorCores >= 2 batch blocks) ----
    if b_blk is None:
        b_blk = b_pad
        if num_tc > 1 and b_pad >= 16:
            half = _round_up(b_pad // num_tc, 8)
            while half > 8 and b_pad % half:
                half -= 8
            if b_pad % half == 0:
                b_blk = half
    else:
        b_blk = _round_up(max(8, min(int(b_blk), b_pad)), 8)
        while b_blk > 8 and b_pad % b_blk:       # round to a valid divisor
            b_blk -= 8
        if b_pad % b_blk:
            b_blk = b_pad
    num_b = b_pad // b_blk

    # --- time blocking: amortize per-grid-step overhead within VMEM budget -
    if t_blk is None:
        t_blk = target_t
    t_blk = max(1, min(int(t_blk), seq))
    per_step_bytes = 2 * 2 * b_blk * h_pad * 4   # 2 bufs x (proj-in + out)
    t_blk = max(1, min(t_blk, stream_budget // max(per_step_bytes, 1)))
    d = _largest_divisor_leq(seq, t_blk)
    if d >= max(1, t_blk // 2):
        t_blk = d                                # prefer clean (no-tail) path
    num_t = -(-seq // t_blk)
    seq_pad = num_t * t_blk
    tail_len = seq - (num_t - 1) * t_blk

    # vreg-pressure guard: full unroll only for a small carried state.
    unroll = True if (b_blk <= 64 and t_blk <= 32) else 8

    f32, bf16 = jnp.float32, jnp.bfloat16
    wh_dtype = bf16 if h2h_bf16 else f32

    # Cast to bf16 BEFORE padding (halves XLA pad traffic); skip pads if clean.
    x_b = x.astype(bf16)
    if seq_pad != seq or b_pad != batch:
        x_b = jnp.pad(x_b, ((0, seq_pad - seq), (0, b_pad - batch), (0, 0)))
    wxT_b = jnp.pad(wx.astype(bf16).T, ((0, 0), (0, h_pad - hid)))
    whT_p = jnp.pad(wh.astype(wh_dtype).T,
                    ((0, h_pad - hid), (0, h_pad - hid)))
    bx_row = jnp.pad(bx.astype(f32), (0, h_pad - hid)).reshape(1, h_pad)
    bxbh_row = jnp.pad((bx + bh).astype(f32),
                       (0, h_pad - hid)).reshape(1, h_pad)

    # 1) Hoisted input projection: one big parallel GEMM over all timesteps.
    proj_api2d, proj_rec2d = _input_projection(
        x_b.reshape(seq_pad * b_pad, in_sz), wxT_b, bx_row, bxbh_row)
    proj_api = proj_api2d.reshape(seq_pad, b_pad, h_pad)   # input2h(x)
    proj_rec = proj_rec2d.reshape(seq_pad, b_pad, h_pad)   # input2h(x) + bh

    # 2) Serial recurrence.
    kernel = functools.partial(_recurrence_kernel, alpha, t_blk, tail_len,
                               unroll)
    grid_spec = pltpu.PrefetchScalarGridSpec(
        num_scalar_prefetch=0,
        grid=(num_b, num_t),
        in_specs=[
            pl.BlockSpec((t_blk, b_blk, h_pad), lambda b, t: (t, b, 0)),  # proj
            pl.BlockSpec((h_pad, h_pad), lambda b, t: (0, 0)),            # Wh^T
        ],
        out_specs=(
            pl.BlockSpec((t_blk, b_blk, h_pad), lambda b, t: (t, b, 0)),  # out
            pl.BlockSpec((b_blk, h_pad), lambda b, t: (b, 0)),            # h_last
        ),
        scratch_shapes=[pltpu.VMEM((b_blk, h_pad), jnp.float32)],
    )

    wh_bytes = 2 if h2h_bf16 else 4
    est = (2 * h_pad * h_pad * wh_bytes          # resident Wh^T (2 bufs)
           + 2 * 2 * t_blk * b_blk * h_pad * 4   # proj-in + out blocks, 2 bufs
           + 3 * b_blk * h_pad * 4)              # h_last bufs + h scratch
    vmem_limit = int(min(max(int(est * 1.5) + (4 << 20), 32 << 20), vmem_cap))

    out_p, hlast_p = pl.pallas_call(
        kernel,
        out_shape=(
            jax.ShapeDtypeStruct((seq_pad, b_pad, h_pad), f32),
            jax.ShapeDtypeStruct((b_pad, h_pad), f32),
        ),
        grid_spec=grid_spec,
        compiler_params=pltpu.CompilerParams(
            dimension_semantics=("parallel", "arbitrary"),
            vmem_limit_bytes=vmem_limit),
    )(proj_rec, whT_p)

    # Skip the slicing passes entirely when shapes are already aligned.
    if seq_pad == seq and b_pad == batch and h_pad == hid:
        return out_p, hlast_p, proj_api
    out = out_p[:seq, :batch, :hid]
    h_final = hlast_p[:batch, :hid]
    proj_out = proj_api[:seq, :batch, :hid]
    return out, h_final, proj_out


def ctrnn_reference(x, wx, bx, wh, bh, alpha):
    """Plain-JAX f32 reference matching the PyTorch module semantics."""
    seq = x.shape[0]
    hid = wx.shape[0]
    h = jnp.zeros((x.shape[1], hid), jnp.float32)
    outs, projs = [], []
    for t in range(seq):
        proj = x[t] @ wx.T + bx
        h_new = jax.nn.relu(proj + h @ wh.T + bh)
        h = h * (1.0 - alpha) + h_new * alpha
        outs.append(h)
        projs.append(proj)
    return jnp.stack(outs, 0), h, jnp.stack(projs, 0)


if __name__ == "__main__":
    # Small shapes consistent with the module's forward.
    seq_len, batch, input_size, hidden_size = 8, 4, 16, 32
    dt, tau = 20.0, 100.0
    alpha = dt / tau

    key = jax.random.PRNGKey(0)
    kx, kwx, kbx, kwh, kbh = jax.random.split(key, 5)

    x = jax.random.normal(kx, (seq_len, batch, input_size), jnp.float32)

    # Deterministic init mimicking nn.Linear's uniform(-1/sqrt(fan_in), +).
    bx_bound = 1.0 / np.sqrt(input_size)
    bh_bound = 1.0 / np.sqrt(hidden_size)
    wx = jax.random.uniform(kwx, (hidden_size, input_size), jnp.float32,
                            -bx_bound, bx_bound)
    bx = jax.random.uniform(kbx, (hidden_size,), jnp.float32, -bx_bound, bx_bound)
    wh = jax.random.uniform(kwh, (hidden_size, hidden_size), jnp.float32,
                            -bh_bound, bh_bound)
    bh = jax.random.uniform(kbh, (hidden_size,), jnp.float32, -bh_bound, bh_bound)

    out, h_final, proj = jax.block_until_ready(
        ctrnn_forward(x, wx, bx, wh, bh, alpha))

    ref_out, ref_h, ref_proj = ctrnn_reference(x, wx, bx, wh, bh, alpha)
    # bf16 MXU inputs (f32 accumulate) -> compare against the f32 reference
    # with a bf16-appropriate tolerance.
    np.testing.assert_allclose(np.asarray(out), np.asarray(ref_out),
                               rtol=5e-2, atol=5e-2)
    np.testing.assert_allclose(np.asarray(h_final), np.asarray(ref_h),
                               rtol=5e-2, atol=5e-2)
    np.testing.assert_allclose(np.asarray(proj), np.asarray(ref_proj),
                               rtol=5e-2, atol=5e-2)

    print("KERNEL_OK")
</pallas_src>

<mosaic_0001>
module attributes {stable_mosaic.version = 11 : i64} {
  func.func @_proj_kernel(%arg0: i32, %arg1: i32, %arg2: memref<64x16xbf16, #tpu.memory_space<vmem>>, %arg3: memref<16x128xbf16, #tpu.memory_space<vmem>>, %arg4: memref<1x128xf32, #tpu.memory_space<vmem>>, %arg5: memref<1x128xf32, #tpu.memory_space<vmem>>, %arg6: memref<64x128xf32, #tpu.memory_space<vmem>>, %arg7: memref<64x128xf32, #tpu.memory_space<vmem>>) attributes {dimension_semantics = [#tpu.dimension_semantics<parallel>, #tpu.dimension_semantics<parallel>], iteration_bounds = array<i64: 1, 1>, scalar_prefetch = 0 : i64, scratch_operands = 0 : i64, tpu.core_type = #tpu.core_type<tc>, window_params = [{transform_indices = @transform_0, window_bounds = array<i64: 64, 16>}, {transform_indices = @transform_1, window_bounds = array<i64: 16, 128>}, {transform_indices = @transform_2, window_bounds = array<i64: 1, 128>}, {transform_indices = @transform_3, window_bounds = array<i64: 1, 128>}, {transform_indices = @transform_4, window_bounds = array<i64: 64, 128>}, {transform_indices = @transform_5, window_bounds = array<i64: 64, 128>}]} {
    %c0 = arith.constant 0 : index
    %c0_0 = arith.constant 0 : index
    %0 = vector.load %arg2[%c0, %c0_0] : memref<64x16xbf16, #tpu.memory_space<vmem>>, vector<64x16xbf16>
    %c0_1 = arith.constant 0 : index
    %c0_2 = arith.constant 0 : index
    %1 = vector.load %arg3[%c0_1, %c0_2] : memref<16x128xbf16, #tpu.memory_space<vmem>>, vector<16x128xbf16>
    %cst = arith.constant dense<0.000000e+00> : vector<64x128xf32>
    %2 = tpu.matmul %0, %1, %cst {dimension_numbers = #tpu.dot_dimension_numbers<[1], [0], [0], [1], [0, 0, 1, 1], [], []>} : vector<64x16xbf16>, vector<16x128xbf16>, vector<64x128xf32> -> vector<64x128xf32>
    %c0_3 = arith.constant 0 : index
    %c0_4 = arith.constant 0 : index
    %3 = vector.load %arg4[%c0_3, %c0_4] : memref<1x128xf32, #tpu.memory_space<vmem>>, vector<1x128xf32>
    %4 = vector.broadcast %3 : vector<1x128xf32> to vector<64x128xf32>
    %5 = arith.addf %2, %4 : vector<64x128xf32>
    %c0_5 = arith.constant 0 : index
    %c0_6 = arith.constant 0 : index
    %6 = vector.load %arg6[%c0_5, %c0_6] : memref<64x128xf32, #tpu.memory_space<vmem>>, vector<64x128xf32>
    tpu.vector_store %arg6[%c0_5, %c0_6], %5 {strides = array<i32>} : memref<64x128xf32, #tpu.memory_space<vmem>>, vector<64x128xf32>,
    %c0_7 = arith.constant 0 : index
    %c0_8 = arith.constant 0 : index
    %7 = vector.load %arg5[%c0_7, %c0_8] : memref<1x128xf32, #tpu.memory_space<vmem>>, vector<1x128xf32>
    %8 = vector.broadcast %7 : vector<1x128xf32> to vector<64x128xf32>
    %9 = arith.addf %2, %8 : vector<64x128xf32>
    %c0_9 = arith.constant 0 : index
    %c0_10 = arith.constant 0 : index
    %10 = vector.load %arg7[%c0_9, %c0_10] : memref<64x128xf32, #tpu.memory_space<vmem>>, vector<64x128xf32>
    tpu.vector_store %arg7[%c0_9, %c0_10], %9 {strides = array<i32>} : memref<64x128xf32, #tpu.memory_space<vmem>>, vector<64x128xf32>,
    return
  }
  func.func @transform_0(%arg0: i32, %arg1: i32) -> (i32, i32) {
    %c0_i32 = arith.constant 0 : i32
    %c0_i32_0 = arith.constant 0 : i32
    return %arg0, %c0_i32 : i32, i32
  }
  func.func @transform_1(%arg0: i32, %arg1: i32) -> (i32, i32) {
    %c0_i32 = arith.constant 0 : i32
    %c0_i32_0 = arith.constant 0 : i32
    return %c0_i32, %arg1 : i32, i32
  }
  func.func @transform_2(%arg0: i32, %arg1: i32) -> (i32, i32) {
    %c0_i32 = arith.constant 0 : i32
    %c0_i32_0 = arith.constant 0 : i32
    return %c0_i32, %arg1 : i32, i32
  }
  func.func @transform_3(%arg0: i32, %arg1: i32) -> (i32, i32) {
    %c0_i32 = arith.constant 0 : i32
    %c0_i32_0 = arith.constant 0 : i32
    return %c0_i32, %arg1 : i32, i32
  }
  func.func @transform_4(%arg0: i32, %arg1: i32) -> (i32, i32) {
    %c0_i32 = arith.constant 0 : i32
    return %arg0, %arg1 : i32, i32
  }
  func.func @transform_5(%arg0: i32, %arg1: i32) -> (i32, i32) {
    %c0_i32 = arith.constant 0 : i32
    return %arg0, %arg1 : i32, i32
  }
}

</mosaic_0001>

<llo_original>
// kernel: tpu_custom_call.1
$region0: #{tpu_custom_call.1}
  #allocation0 [shape = 'u32[]', space=smem, size = 0x4, offset = 0x4, fixed_abs, tag = 'smem constant byte address 0x4 - core index']
  #allocation1 [shape = 'u32[144,128]{1,0:T(1,128)}', space=vmem, size = 0x12000, scoped, tag = 'internal scratch']
  %s0 = inlined_call_operand.vmem [shape: bf16[64,16], index: 0, kind: input, shape index: {}]
  %s1 = inlined_call_operand.vmem [shape: bf16[16,128], index: 1, kind: input, shape index: {}]
  %s2 = inlined_call_operand.vmem [shape: f32[1,128], index: 2, kind: input, shape index: {}]
  %s3 = inlined_call_operand.vmem [shape: f32[1,128], index: 3, kind: input, shape index: {}]
  %s4 = inlined_call_operand.hbm [shape: f32[64,128], index: 4, kind: output, shape index: {0}]
  %s5 = inlined_call_operand.hbm [shape: f32[64,128], index: 5, kind: output, shape index: {1}]
  %6 = xla_tuple %s4, %s5
  %s7 = sld [smem:[#allocation0]]
  $region34: #{tpu_custom_call.1} parent=0
    _
  %s9 = ssub.s32 1, %s7
  %s10 = scalar_select 0, %s9, %s7
  $region1: #{tpu_custom_call.1} parent=0
    #allocation2 [shape = 'u8[32768]{0}', space=vmem, size = 0x8000, scoped, tag = 'output window, operand 0, single buffered']
    #allocation3 [shape = 's32[1]{0}', space=sflag, size = 0x4, scoped, tag = 'scoped memory for tpu_custom_call.1']
    #allocation4 [shape = 'u8[32768]{0}', space=vmem, size = 0x8000, scoped, tag = 'output window, operand 1, single buffered']
    #allocation5 [shape = 's32[1]{0}', space=sflag, size = 0x4, scoped, tag = 'scoped memory for tpu_custom_call.1']
    %11 = vsyncpa [#allocation3], 0
    %12 = vsyncpa [#allocation5], 0
    // Predicated region
    $region2: #{tpu_custom_call.1} parent=1 // pred_check
      _
    $region3: #{tpu_custom_call.1} parent=1 // pred_check_branch
      %14 = sbr.rel (0) target = $region5
    $region4: #{tpu_custom_call.1} parent=1 // pred_region
      _
    $region5: #{tpu_custom_call.1} parent=1 // pred_fallthru
      _
    // Predicated region
    $region6: #{tpu_custom_call.1} parent=1 // pred_check
      _
    $region7: #{tpu_custom_call.1} parent=1 // pred_check_branch
      %16 = sbr.rel (0) target = $region9
    $region8: #{tpu_custom_call.1} parent=1 // pred_region
      _
    $region9: #{tpu_custom_call.1} parent=1 // pred_fallthru
      _
    // Predicated region
    $region10: #{tpu_custom_call.1} parent=1 // pred_check
      _
    $region11: #{tpu_custom_call.1} parent=1 // pred_check_branch
      %18 = sbr.rel (0) target = $region13
    $region12: #{tpu_custom_call.1} parent=1 // pred_region
      _
    $region13: #{tpu_custom_call.1} parent=1 // pred_fallthru
      _
    // Predicated region
    $region14: #{tpu_custom_call.1} parent=1 // pred_check
      _
    $region15: #{tpu_custom_call.1} parent=1 // pred_check_branch
      %20 = sbr.rel (0) target = $region17
    $region16: #{tpu_custom_call.1} parent=1 // pred_region
      _
    $region17: #{tpu_custom_call.1} parent=1 // pred_fallthru
      _
    %v22 = vld [vmem:[%s0] sm:$0xf]
    %v23 = vld [vmem:[%s0 + $0x4] sm:$0xf]
    %v24 = vld [vmem:[%s0 + $0x8] sm:$0xf]
    %v25 = vld [vmem:[%s0 + $0xc] sm:$0xf]
    %v26 = vld [vmem:[%s0 + $0x10] sm:$0xf]
    %v27 = vld [vmem:[%s0 + $0x14] sm:$0xf]
    %v28 = vld [vmem:[%s0 + $0x18] sm:$0xf]
    %v29 = vld [vmem:[%s0 + $0x1c] sm:$0xf]
    %v30 = vld [vmem:[%s1] sm:$0xf]
    %v31 = vld [vmem:[%s1 + $0x4] sm:$0xf]
    %v40 = vunpack.c.l.b16 %v22
    %v41 = vunpack.c.l.b16 %v23
    %v42 = vunpack.c.l.b16 %v24
    %v43 = vunpack.c.l.b16 %v25
    %v44 = vunpack.c.l.b16 %v26
    %v45 = vunpack.c.l.b16 %v27
    %v46 = vunpack.c.l.b16 %v28
    %v47 = vunpack.c.l.b16 %v29
    %v48 = vpack.c.b16 %v41, %v40
    %v49 = vpack.c.b16 %v43, %v42
    %v50 = vpack.c.b16 %v45, %v44
    %v51 = vpack.c.b16 %v47, %v46
    %v54 = vunpack.c.l.b16 %v30
    %v55 = vunpack.c.l.b16 %v31
    %v56 = vpack.c.b16 %v55, %v54
    %vm58 = vcmask 130048
    %v60 = vsel %vm58, %v48, 0
    %v63 = vsel %vm58, %v49, 0
    %v66 = vsel %vm58, %v50, 0
    %v69 = vsel %vm58, %v51, 0
    %71 = vmatprep.subr.bf16.mxu0 0
    %72 = vmatpush1.bf16.msra.mxu0 0
    %73 = vmatprep.subr.bf16.mxu0 0
    %74 = vmatpush1.bf16.msra.mxu0 0
    %75 = vmatprep.subr.bf16.mxu0 0
    %76 = vmatpush1.bf16.msra.mxu0 0
    %77 = vmatprep.subr.bf16.mxu0 0
    %78 = vmatpush1.bf16.msra.mxu0 0
    %79 = vmatprep.subr.bf16.mxu0 0
    %80 = vmatpush1.bf16.msra.mxu0 0
    %81 = vmatprep.subr.bf16.mxu0 0
    %82 = vmatpush1.bf16.msra.mxu0 0
    %83 = vmatprep.subr.bf16.mxu0 0
    %84 = vmatpush1.bf16.msra.mxu0 0
    %85 = vmatprep.subr.bf16.mxu0 0
    %86 = vmatpush1.bf16.msra.mxu0 %v56
    %87 = vmatprep.subr.bf16.mxu0 0
    %88 = vmatpush2.bf16.msra.mxu0 0
    %89 = vmatprep.subr.bf16.mxu0 0
    %90 = vmatpush2.bf16.msra.mxu0 0
    %91 = vmatprep.subr.bf16.mxu0 0
    %92 = vmatpush2.bf16.msra.mxu0 0
    %93 = vmatprep.subr.bf16.mxu0 0
    %94 = vmatpush2.bf16.msra.mxu0 0
    %95 = vmatprep.subr.bf16.mxu0 0
    %96 = vmatpush2.bf16.msra.mxu0 0
    %97 = vmatprep.subr.bf16.mxu0 0
    %98 = vmatpush2.bf16.msra.mxu0 0
    %99 = vmatprep.subr.bf16.mxu0 0
    %100 = vmatpush2.bf16.msra.mxu0 0
    %101 = vmatprep.subr.bf16.mxu0 0
    %102 = vmatpush2.bf16.msra.mxu0 0
    %103 = vmatprep.mubr.bf16.mxu0 0
    %104 = vmatmul.mubr.bf16.gmra.mxu0 %v60
    %v105 = vpop.f32.mrf.mxu0
    %v106 = vadd.f32 0.0, %v105
    %v107 = vpop.f32.mrf.mxu0
    %v108 = vpop.f32.mrf.mxu0
    %v109 = vadd.f32 0.0, %v108
    %v110 = vpop.f32.mrf.mxu0
    %111 = vmatprep.mubr.bf16.mxu0 0
    %112 = vmatmul.mubr.bf16.gmra.mxu0 %v63
    %v113 = vpop.f32.mrf.mxu0
    %v114 = vadd.f32 0.0, %v113
    %v115 = vpop.f32.mrf.mxu0
    %v116 = vpop.f32.mrf.mxu0
    %v117 = vadd.f32 0.0, %v116
    %v118 = vpop.f32.mrf.mxu0
    %119 = vmatprep.mubr.bf16.mxu0 0
    %120 = vmatmul.mubr.bf16.gmra.mxu0 %v66
    %v121 = vpop.f32.mrf.mxu0
    %v122 = vadd.f32 0.0, %v121
    %v123 = vpop.f32.mrf.mxu0
    %v124 = vpop.f32.mrf.mxu0
    %v125 = vadd.f32 0.0, %v124
    %v126 = vpop.f32.mrf.mxu0
    %127 = vmatprep.mubr.bf16.mxu0 0
    %128 = vmatmul.mubr.bf16.gmra.mxu0 %v69
    %v129 = vpop.f32.mrf.mxu0
    %v130 = vadd.f32 0.0, %v129
    %v131 = vpop.f32.mrf.mxu0
    %v132 = vpop.f32.mrf.mxu0
    %v133 = vadd.f32 0.0, %v132
    %v134 = vpop.f32.mrf.mxu0
    %135 = vdwg.mxu0
    %v136 = vld [vmem:[%s2] sm:$0x1]
    %v138 = vlaneseq
    %v139 = vshrl.u32 %v138, 7
    %v140 = vsub.s32 0, %v139
    %v141 = vrot.slane %v136, %v140
    %v143 = vadd.f32 %v106, %v141
    %v144 = vadd.f32 %v109, %v141
    %v145 = vadd.f32 %v114, %v141
    %v146 = vadd.f32 %v117, %v141
    %v147 = vadd.f32 %v122, %v141
    %v148 = vadd.f32 %v125, %v141
    %v149 = vadd.f32 %v130, %v141
    %v150 = vadd.f32 %v133, %v141
    %151 = vst [vmem:[#allocation2] sm:$0xff] %v143
    %152 = vst [vmem:[#allocation2 + $0x8] sm:$0xff] %v144
    %153 = vst [vmem:[#allocation2 + $0x10] sm:$0xff] %v145
    %154 = vst [vmem:[#allocation2 + $0x18] sm:$0xff] %v146
    %155 = vst [vmem:[#allocation2 + $0x20] sm:$0xff] %v147
    %156 = vst [vmem:[#allocation2 + $0x28] sm:$0xff] %v148
    %157 = vst [vmem:[#allocation2 + $0x30] sm:$0xff] %v149
    %158 = vst [vmem:[#allocation2 + $0x38] sm:$0xff] %v150
    %v159 = vld [vmem:[%s3] sm:$0x1]
    %v161 = vlaneseq
    %v162 = vshrl.u32 %v161, 7
    %v163 = vsub.s32 0, %v162
    %v164 = vrot.slane %v159, %v163
    %v166 = vadd.f32 %v106, %v164
    %v167 = vadd.f32 %v109, %v164
    %v168 = vadd.f32 %v114, %v164
    %v169 = vadd.f32 %v117, %v164
    %v170 = vadd.f32 %v122, %v164
    %v171 = vadd.f32 %v125, %v164
    %v172 = vadd.f32 %v130, %v164
    %v173 = vadd.f32 %v133, %v164
    %174 = vst [vmem:[#allocation4] sm:$0xff] %v166
    %175 = vst [vmem:[#allocation4 + $0x8] sm:$0xff] %v167
    %176 = vst [vmem:[#allocation4 + $0x10] sm:$0xff] %v168
    %177 = vst [vmem:[#allocation4 + $0x18] sm:$0xff] %v169
    %178 = vst [vmem:[#allocation4 + $0x20] sm:$0xff] %v170
    %179 = vst [vmem:[#allocation4 + $0x28] sm:$0xff] %v171
    %180 = vst [vmem:[#allocation4 + $0x30] sm:$0xff] %v172
    %181 = vst [vmem:[#allocation4 + $0x38] sm:$0xff] %v173
    // Predicated region
    $region18: #{tpu_custom_call.1} parent=1 // pred_check
      _
    $region19: #{tpu_custom_call.1} parent=1 // pred_check_branch
      %183 = sbr.rel (0) target = $region21
    $region20: #{tpu_custom_call.1} parent=1 // pred_region
      %s185 = ssub.s32 1024, 1024
      %186 = vsyncadd [#allocation3], %s185
      %s187 = sshll.u32 [#allocation2], 4
      %s188 = int_to_ptr.vmem [resolvable:$true] %s187
      %193 = dma.vmem_to_hbm [thread:$0]  %s188, 1024, %s4, [#allocation3], 128, 128, 8
    $region21: #{tpu_custom_call.1} parent=1 // pred_fallthru
      _
    // Predicated region
    $region22: #{tpu_custom_call.1} parent=1 // pred_check
      _
    $region23: #{tpu_custom_call.1} parent=1 // pred_check_branch
      %195 = sbr.rel (0) target = $region25
    $region24: #{tpu_custom_call.1} parent=1 // pred_region
      %s197 = ssub.s32 1024, 1024
      %198 = vsyncadd [#allocation5], %s197
      %s199 = sshll.u32 [#allocation4], 4
      %s200 = int_to_ptr.vmem [resolvable:$true] %s199
      %205 = dma.vmem_to_hbm [thread:$0]  %s200, 1024, %s5, [#allocation5], 128, 128, 8
    $region25: #{tpu_custom_call.1} parent=1 // pred_fallthru
      _
    // Predicated region
    $region26: #{tpu_custom_call.1} parent=1 // pred_check
      _
    $region27: #{tpu_custom_call.1} parent=1 // pred_check_branch
      %207 = sbr.rel (0) target = $region29
    $region28: #{tpu_custom_call.1} parent=1 // pred_region
      %208 = dma.done [#allocation3], 1024
    $region29: #{tpu_custom_call.1} parent=1 // pred_fallthru
      _
    // Predicated region
    $region30: #{tpu_custom_call.1} parent=1 // pred_check
      _
    $region31: #{tpu_custom_call.1} parent=1 // pred_check_branch
      %210 = sbr.rel (0) target = $region33
    $region32: #{tpu_custom_call.1} parent=1 // pred_region
      %211 = dma.done [#allocation5], 1024
    $region33: #{tpu_custom_call.1} parent=1 // pred_fallthru
      _
    %212 = vsyncpa [#allocation3], 1
    %213 = vsyncpa [#allocation5], 1

</llo_original>
